<compile_context>
chip_gen: v6e
topology: v6e:2x2x1
jax: 0.10.0
libtpu: 0.0.40
codegen_flags: <defaults>
</compile_context>

<pallas_src>
import jax
import jax.numpy as jnp
from jax.experimental import pallas as pl
from jax.experimental.pallas import tpu as pltpu

_MIB = 1024 * 1024


def _fused_pipeline_kernel(x_ref, w1_ref, b1_ref, w2_ref, b2_ref, o_ref):
    # One grid step == one row-tile flowing through both fused pipeline stations.
    # Operands arrive as f32 (no host-side cast round trip); in-kernel VPU casts to bf16
    # feed the MXU, accumulation and the bias+ReLU epilogue stay f32.
    x = x_ref[...].astype(jnp.bfloat16)                                 # (rows, D_IN)
    w1 = w1_ref[...].astype(jnp.bfloat16)                               # (D_IN, D_HID)
    h = jnp.dot(x, w1, preferred_element_type=jnp.float32)              # MXU, f32 acc
    h = jnp.maximum(h + b1_ref[...], 0.0)                               # station 0 epilogue
    w2 = w2_ref[...].astype(jnp.bfloat16)                               # (D_HID, D_OUT)
    y = jnp.dot(h.astype(jnp.bfloat16), w2, preferred_element_type=jnp.float32)
    o_ref[...] = (y + b2_ref[...]).astype(o_ref.dtype)                  # station 1 epilogue


def _hw_profile():
    """Return (tile_budget_bytes, vmem_limit_bytes, two_tensorcores_hint) for the local chip."""
    phys = None
    try:
        phys = getattr(pltpu.get_tpu_info(), "vmem_capacity_bytes", None)
    except Exception:
        phys = None
    kind = ""
    try:
        kind = jax.devices()[0].device_kind.lower()
    except Exception:
        pass
    if phys is None:
        phys = 64 * _MIB if "7" in kind else 128 * _MIB   # conservative default
    two_tc = ("7" in kind) or (phys is not None and phys <= 64 * _MIB)
    if phys >= 128 * _MIB:
        # v5e / v6e: 128 MiB physical; default scoped limit is small, so raise it explicitly.
        return 64 * _MIB, 80 * _MIB, two_tc
    # v7x: 64 MiB physical / 32 MiB scoped — do NOT inherit the 128-MiB-chip budget.
    return 20 * _MIB, 32 * _MIB, two_tc


def _choose_row_tile(batch, max_rows):
    """Largest row tile <= max_rows that divides `batch` and keeps tiles sublane-aligned.

    Preference order: multiple of 16 (bf16 sublane packing) > multiple of 8 (f32 output
    tiling) > the full batch (a block equal to the full dim is always legal).
    """
    if max_rows >= batch:
        return batch
    div16 = [d for d in range(16, batch, 16) if batch % d == 0 and d <= max_rows]
    if div16:
        return max(div16)
    div8 = [d for d in range(8, batch, 8) if batch % d == 0 and d <= max_rows]
    if div8:
        return max(div8)
    # Nothing aligned fits the budget: correctness over budget — smallest aligned divisor,
    # or the whole batch if it has no aligned divisor.
    div8_all = [d for d in range(8, batch, 8) if batch % d == 0]
    return min(div8_all) if div8_all else batch


def pipeline_parallel_forward(x, w1, b1, w2, b2, mb_size):
    """Equivalent of PipelineParallel.forward: microbatch split -> station chain -> concat.

    `mb_size` is kept for API parity (the module requires B % mb_size == 0), but the
    hardware row tile is chosen from VMEM/MXU fit — results are identical because all
    stations are row-wise.
    """
    B, d_in = x.shape
    assert B % mb_size == 0, "batch must divide evenly into microbatches"
    d_hid = w1.shape[1]
    d_out = w2.shape[1]
    out_dtype = x.dtype

    tile_budget, vmem_limit, two_tc = _hw_profile()

    # ---- VMEM accounting (f32 resident operands + in-kernel bf16 copies) ---------------
    # Grid-invariant operands are single-buffered (pl.Buffered(1)), so no 2x on weights.
    weight_vmem = (4 * (d_in * d_hid + d_hid * d_out + d_hid + d_out)   # resident f32
                   + 2 * (d_in * d_hid + d_hid * d_out))                # bf16 cast temps
    per_row_bytes = (2 * 4 * d_in            # double-buffered f32 x tile
                     + 2 * d_in              # bf16 x copy
                     + 4 * d_hid + 2 * d_hid # f32 hidden + bf16 hidden copy
                     + 4 * d_out             # f32 result temp
                     + 2 * 4 * d_out)        # double-buffered f32 out tile
    if weight_vmem + 16 * per_row_bytes > tile_budget:
        # TODO(synk): stream / K-tile the weights for layers too large to keep resident.
        raise ValueError(
            f"pipeline weights ({weight_vmem / _MIB:.1f} MiB) do not fit the "
            f"{tile_budget / _MIB:.0f} MiB VMEM tile budget; weight streaming not implemented")
    max_rows = (tile_budget - weight_vmem) // per_row_bytes
    row_tile = _choose_row_tile(B, max_rows)

    # v7x has 2 TensorCores per chip: for large batches keep >= 2 parallel grid steps so
    # Mosaic can shard rows across cores.  Not worth it for tiny, latency-bound batches.
    if two_tc and B >= 256 and B // row_tile < 2:
        cap = ((-(-B // 2) + 15) // 16) * 16
        alt = _choose_row_tile(B, min(max_rows, cap))
        if alt < B:
            row_tile = alt
    n_tiles = B // row_tile

    b1_2d = b1.reshape(1, d_hid).astype(jnp.float32)
    b2_2d = b2.reshape(1, d_out).astype(jnp.float32)

    cost = pl.CostEstimate(
        flops=2 * B * (d_in * d_hid + d_hid * d_out),
        transcendentals=0,
        bytes_accessed=4 * (B * d_in + d_in * d_hid + d_hid
                            + d_hid * d_out + d_out + B * d_out),
    )

    def build(single_buffer_invariants):
        def inv_spec(shape):
            # Grid-invariant operand: same block every step; single-buffer it.
            if single_buffer_invariants:
                return pl.BlockSpec(shape, lambda i: (0,) * len(shape),
                                    pipeline_mode=pl.Buffered(1))
            return pl.BlockSpec(shape, lambda i: (0,) * len(shape))

        grid_spec = pltpu.PrefetchScalarGridSpec(
            num_scalar_prefetch=0,
            grid=(n_tiles,),
            in_specs=[
                pl.BlockSpec((row_tile, d_in), lambda i: (i, 0)),   # row tile i
                inv_spec((d_in, d_hid)),                            # station-0 weight
                inv_spec((1, d_hid)),                               # station-0 bias
                inv_spec((d_hid, d_out)),                           # station-1 weight
                inv_spec((1, d_out)),                               # station-1 bias
            ],
            out_specs=pl.BlockSpec((row_tile, d_out), lambda i: (i, 0)),
        )
        return pl.pallas_call(
            _fused_pipeline_kernel,
            out_shape=jax.ShapeDtypeStruct((B, d_out), out_dtype),
            grid_spec=grid_spec,
            cost_estimate=cost,
            compiler_params=pltpu.CompilerParams(
                dimension_semantics=("parallel",),   # row tiles are independent
                vmem_limit_bytes=vmem_limit,
            ),
        )

    args = (x, w1, b1_2d, w2, b2_2d)
    try:
        return build(single_buffer_invariants=True)(*args)
    except Exception:
        # Fallback for Pallas versions without BlockSpec(pipeline_mode=...): default buffering.
        return build(single_buffer_invariants=False)(*args)


def _reference_bf16_operands(x, w1, b1, w2, b2):
    # Same numerics as the kernel: bf16 MXU operands, f32 accumulation, f32 epilogue.
    h = jnp.dot(x.astype(jnp.bfloat16), w1.astype(jnp.bfloat16),
                preferred_element_type=jnp.float32) + b1
    h = jnp.maximum(h, 0.0)
    y = jnp.dot(h.astype(jnp.bfloat16), w2.astype(jnp.bfloat16),
                preferred_element_type=jnp.float32) + b2
    return y


def _reference_f32(x, w1, b1, w2, b2):
    h = jnp.maximum(x @ w1 + b1, 0.0)
    return h @ w2 + b2


if __name__ == "__main__":
    # Small shapes consistent with the module: batch split into microbatches of mb_size.
    B = 16           # total batch
    MB_SIZE = 8      # module-level microbatch size (semantics only; HW tile chosen separately)
    D_IN, D_HID, D_OUT = 128, 256, 128

    key = jax.random.PRNGKey(0)
    k_x, k_w1, k_b1, k_w2, k_b2 = jax.random.split(key, 5)

    x = jax.random.normal(k_x, (B, D_IN), dtype=jnp.float32)
    # Deterministic synthetic "submodule" parameters (two Linear stations).
    w1 = jax.random.normal(k_w1, (D_IN, D_HID), dtype=jnp.float32) * 0.05
    b1 = jax.random.normal(k_b1, (D_HID,), dtype=jnp.float32) * 0.05
    w2 = jax.random.normal(k_w2, (D_HID, D_OUT), dtype=jnp.float32) * 0.05
    b2 = jax.random.normal(k_b2, (D_OUT,), dtype=jnp.float32) * 0.05

    out = pipeline_parallel_forward(x, w1, b1, w2, b2, MB_SIZE)
    out = jax.block_until_ready(out)

    assert out.shape == (B, D_OUT)
    # Tight check against a reference with identical bf16-operand / f32-accumulate numerics.
    ref_bf16 = _reference_bf16_operands(x, w1, b1, w2, b2)
    assert jnp.allclose(out, ref_bf16, atol=2e-3, rtol=2e-3), "kernel mismatch vs bf16-operand reference"
    # Loose sanity check against the full-f32 math of the original module.
    ref_f32 = _reference_f32(x, w1, b1, w2, b2)
    assert jnp.allclose(out, ref_f32, atol=5e-2, rtol=5e-2), "kernel drifted from f32 reference"

    # TODO(synk): the reference module's backward hook / prod_line custom autograd pipeline
    # and per-submodule device placement are training/placement plumbing and are not translated.
    print("KERNEL_OK")
</pallas_src>

<mosaic_0001>
module attributes {stable_mosaic.version = 11 : i64} {
  func.func @_fused_pipeline_kernel(%arg0: i32, %arg1: memref<16x128xf32, #tpu.memory_space<vmem>>, %arg2: memref<128x256xf32, #tpu.memory_space<vmem>>, %arg3: memref<1x256xf32, #tpu.memory_space<vmem>>, %arg4: memref<256x128xf32, #tpu.memory_space<vmem>>, %arg5: memref<1x128xf32, #tpu.memory_space<vmem>>, %arg6: memref<16x128xf32, #tpu.memory_space<vmem>>) attributes {dimension_semantics = [#tpu.dimension_semantics<parallel>], iteration_bounds = array<i64: 1>, scalar_prefetch = 0 : i64, scratch_operands = 0 : i64, tpu.core_type = #tpu.core_type<tc>, window_params = [{transform_indices = @transform_0, window_bounds = array<i64: 16, 128>}, {pipeline_mode = #tpu.pipeline_mode<synchronous>, transform_indices = @transform_1, window_bounds = array<i64: 128, 256>}, {pipeline_mode = #tpu.pipeline_mode<synchronous>, transform_indices = @transform_2, window_bounds = array<i64: 1, 256>}, {pipeline_mode = #tpu.pipeline_mode<synchronous>, transform_indices = @transform_3, window_bounds = array<i64: 256, 128>}, {pipeline_mode = #tpu.pipeline_mode<synchronous>, transform_indices = @transform_4, window_bounds = array<i64: 1, 128>}, {transform_indices = @transform_5, window_bounds = array<i64: 16, 128>}]} {
    %c0 = arith.constant 0 : index
    %c0_0 = arith.constant 0 : index
    %0 = vector.load %arg1[%c0, %c0_0] : memref<16x128xf32, #tpu.memory_space<vmem>>, vector<16x128xf32>
    %1 = arith.truncf %0 : vector<16x128xf32> to vector<16x128xbf16>
    %c0_1 = arith.constant 0 : index
    %c0_2 = arith.constant 0 : index
    %2 = vector.load %arg2[%c0_1, %c0_2] : memref<128x256xf32, #tpu.memory_space<vmem>>, vector<128x256xf32>
    %3 = arith.truncf %2 : vector<128x256xf32> to vector<128x256xbf16>
    %cst = arith.constant dense<0.000000e+00> : vector<16x256xf32>
    %4 = tpu.matmul %1, %3, %cst {dimension_numbers = #tpu.dot_dimension_numbers<[1], [0], [0], [1], [0, 0, 1, 1], [], []>} : vector<16x128xbf16>, vector<128x256xbf16>, vector<16x256xf32> -> vector<16x256xf32>
    %c0_3 = arith.constant 0 : index
    %c0_4 = arith.constant 0 : index
    %5 = vector.load %arg3[%c0_3, %c0_4] : memref<1x256xf32, #tpu.memory_space<vmem>>, vector<1x256xf32>
    %6 = vector.broadcast %5 : vector<1x256xf32> to vector<16x256xf32>
    %7 = arith.addf %4, %6 : vector<16x256xf32>
    %cst_5 = arith.constant 0.000000e+00 : f32
    %8 = vector.broadcast %cst_5 : f32 to vector<16x256xf32>
    %9 = arith.maximumf %7, %8 : vector<16x256xf32>
    %c0_6 = arith.constant 0 : index
    %c0_7 = arith.constant 0 : index
    %10 = vector.load %arg4[%c0_6, %c0_7] : memref<256x128xf32, #tpu.memory_space<vmem>>, vector<256x128xf32>
    %11 = arith.truncf %10 : vector<256x128xf32> to vector<256x128xbf16>
    %12 = arith.truncf %9 : vector<16x256xf32> to vector<16x256xbf16>
    %cst_8 = arith.constant dense<0.000000e+00> : vector<16x128xf32>
    %13 = tpu.matmul %12, %11, %cst_8 {dimension_numbers = #tpu.dot_dimension_numbers<[1], [0], [0], [1], [0, 0, 1, 1], [], []>} : vector<16x256xbf16>, vector<256x128xbf16>, vector<16x128xf32> -> vector<16x128xf32>
    %c0_9 = arith.constant 0 : index
    %c0_10 = arith.constant 0 : index
    %14 = vector.load %arg5[%c0_9, %c0_10] : memref<1x128xf32, #tpu.memory_space<vmem>>, vector<1x128xf32>
    %15 = vector.broadcast %14 : vector<1x128xf32> to vector<16x128xf32>
    %16 = arith.addf %13, %15 : vector<16x128xf32>
    %c0_11 = arith.constant 0 : index
    %c0_12 = arith.constant 0 : index
    %17 = vector.load %arg6[%c0_11, %c0_12] : memref<16x128xf32, #tpu.memory_space<vmem>>, vector<16x128xf32>
    tpu.vector_store %arg6[%c0_11, %c0_12], %16 {strides = array<i32>} : memref<16x128xf32, #tpu.memory_space<vmem>>, vector<16x128xf32>,
    return
  }
  func.func @transform_0(%arg0: i32) -> (i32, i32) {
    %c0_i32 = arith.constant 0 : i32
    %c0_i32_0 = arith.constant 0 : i32
    return %arg0, %c0_i32 : i32, i32
  }
  func.func @transform_1(%arg0: i32) -> (i32, i32) {
    %c0_i32 = arith.constant 0 : i32
    %c0_i32_0 = arith.constant 0 : i32
    %c0_i32_1 = arith.constant 0 : i32
    return %c0_i32, %c0_i32_0 : i32, i32
  }
  func.func @transform_2(%arg0: i32) -> (i32, i32) {
    %c0_i32 = arith.constant 0 : i32
    %c0_i32_0 = arith.constant 0 : i32
    %c0_i32_1 = arith.constant 0 : i32
    return %c0_i32, %c0_i32_0 : i32, i32
  }
  func.func @transform_3(%arg0: i32) -> (i32, i32) {
    %c0_i32 = arith.constant 0 : i32
    %c0_i32_0 = arith.constant 0 : i32
    %c0_i32_1 = arith.constant 0 : i32
    return %c0_i32, %c0_i32_0 : i32, i32
  }
  func.func @transform_4(%arg0: i32) -> (i32, i32) {
    %c0_i32 = arith.constant 0 : i32
    %c0_i32_0 = arith.constant 0 : i32
    %c0_i32_1 = arith.constant 0 : i32
    return %c0_i32, %c0_i32_0 : i32, i32
  }
  func.func @transform_5(%arg0: i32) -> (i32, i32) {
    %c0_i32 = arith.constant 0 : i32
    %c0_i32_0 = arith.constant 0 : i32
    return %arg0, %c0_i32 : i32, i32
  }
}

module attributes {stable_mosaic.version = 11 : i64} {
  func.func @_fused_pipeline_kernel(%arg0: i32, %arg1: memref<16x128xf32, #tpu.memory_space<vmem>>, %arg2: memref<128x256xf32, #tpu.memory_space<vmem>>, %arg3: memref<1x256xf32, #tpu.memory_space<vmem>>, %arg4: memref<256x128xf32, #tpu.memory_space<vmem>>, %arg5: memref<1x128xf32, #tpu.memory_space<vmem>>, %arg6: memref<16x128xf32, #tpu.memory_space<vmem>>) attributes {dimension_semantics = [#tpu.dimension_semantics<parallel>], iteration_bounds = array<i64: 1>, scalar_prefetch = 0 : i64, scratch_operands = 0 : i64, tpu.core_type = #tpu.core_type<tc>, window_params = [{transform_indices = @transform_0, window_bounds = array<i64: 16, 128>}, {pipeline_mode = #tpu.pipeline_mode<synchronous>, transform_indices = @transform_1, window_bounds = array<i64: 128, 256>}, {pipeline_mode = #tpu.pipeline_mode<synchronous>, transform_indices = @transform_2, window_bounds = array<i64: 1, 256>}, {pipeline_mode = #tpu.pipeline_mode<synchronous>, transform_indices = @transform_3, window_bounds = array<i64: 256, 128>}, {pipeline_mode = #tpu.pipeline_mode<synchronous>, transform_indices = @transform_4, window_bounds = array<i64: 1, 128>}, {transform_indices = @transform_5, window_bounds = array<i64: 16, 128>}]} {
    %c0 = arith.constant 0 : index
    %c0_0 = arith.constant 0 : index
    %0 = vector.load %arg1[%c0, %c0_0] : memref<16x128xf32, #tpu.memory_space<vmem>>, vector<16x128xf32>
    %1 = arith.truncf %0 : vector<16x128xf32> to vector<16x128xbf16>
    %c0_1 = arith.constant 0 : index
    %c0_2 = arith.constant 0 : index
    %2 = vector.load %arg2[%c0_1, %c0_2] : memref<128x256xf32, #tpu.memory_space<vmem>>, vector<128x256xf32>
    %3 = arith.truncf %2 : vector<128x256xf32> to vector<128x256xbf16>
    %cst = arith.constant dense<0.000000e+00> : vector<16x256xf32>
    %4 = tpu.matmul %1, %3, %cst {dimension_numbers = #tpu.dot_dimension_numbers<[1], [0], [0], [1], [0, 0, 1, 1], [], []>} : vector<16x128xbf16>, vector<128x256xbf16>, vector<16x256xf32> -> vector<16x256xf32>
    %c0_3 = arith.constant 0 : index
    %c0_4 = arith.constant 0 : index
    %5 = vector.load %arg3[%c0_3, %c0_4] : memref<1x256xf32, #tpu.memory_space<vmem>>, vector<1x256xf32>
    %6 = vector.broadcast %5 : vector<1x256xf32> to vector<16x256xf32>
    %7 = arith.addf %4, %6 : vector<16x256xf32>
    %cst_5 = arith.constant 0.000000e+00 : f32
    %8 = vector.broadcast %cst_5 : f32 to vector<16x256xf32>
    %9 = arith.maximumf %7, %8 : vector<16x256xf32>
    %c0_6 = arith.constant 0 : index
    %c0_7 = arith.constant 0 : index
    %10 = vector.load %arg4[%c0_6, %c0_7] : memref<256x128xf32, #tpu.memory_space<vmem>>, vector<256x128xf32>
    %11 = arith.truncf %10 : vector<256x128xf32> to vector<256x128xbf16>
    %12 = arith.truncf %9 : vector<16x256xf32> to vector<16x256xbf16>
    %cst_8 = arith.constant dense<0.000000e+00> : vector<16x128xf32>
    %13 = tpu.matmul %12, %11, %cst_8 {dimension_numbers = #tpu.dot_dimension_numbers<[1], [0], [0], [1], [0, 0, 1, 1], [], []>} : vector<16x256xbf16>, vector<256x128xbf16>, vector<16x128xf32> -> vector<16x128xf32>
    %c0_9 = arith.constant 0 : index
    %c0_10 = arith.constant 0 : index
    %14 = vector.load %arg5[%c0_9, %c0_10] : memref<1x128xf32, #tpu.memory_space<vmem>>, vector<1x128xf32>
    %15 = vector.broadcast %14 : vector<1x128xf32> to vector<16x128xf32>
    %16 = arith.addf %13, %15 : vector<16x128xf32>
    %c0_11 = arith.constant 0 : index
    %c0_12 = arith.constant 0 : index
    %17 = vector.load %arg6[%c0_11, %c0_12] : memref<16x128xf32, #tpu.memory_space<vmem>>, vector<16x128xf32>
    tpu.vector_store %arg6[%c0_11, %c0_12], %16 {strides = array<i32>} : memref<16x128xf32, #tpu.memory_space<vmem>>, vector<16x128xf32>,
    return
  }
  func.func @transform_0(%arg0: i32) -> (i32, i32) {
    %c0_i32 = arith.constant 0 : i32
    %c0_i32_0 = arith.constant 0 : i32
    return %arg0, %c0_i32 : i32, i32
  }
  func.func @transform_1(%arg0: i32) -> (i32, i32) {
    %c0_i32 = arith.constant 0 : i32
    %c0_i32_0 = arith.constant 0 : i32
    %c0_i32_1 = arith.constant 0 : i32
    return %c0_i32, %c0_i32_0 : i32, i32
  }
  func.func @transform_2(%arg0: i32) -> (i32, i32) {
    %c0_i32 = arith.constant 0 : i32
    %c0_i32_0 = arith.constant 0 : i32
    %c0_i32_1 = arith.constant 0 : i32
    return %c0_i32, %c0_i32_0 : i32, i32
  }
  func.func @transform_3(%arg0: i32) -> (i32, i32) {
    %c0_i32 = arith.constant 0 : i32
    %c0_i32_0 = arith.constant 0 : i32
    %c0_i32_1 = arith.constant 0 : i32
    return %c0_i32, %c0_i32_0 : i32, i32
  }
  func.func @transform_4(%arg0: i32) -> (i32, i32) {
    %c0_i32 = arith.constant 0 : i32
    %c0_i32_0 = arith.constant 0 : i32
    %c0_i32_1 = arith.constant 0 : i32
    return %c0_i32, %c0_i32_0 : i32, i32
  }
  func.func @transform_5(%arg0: i32) -> (i32, i32) {
    %c0_i32 = arith.constant 0 : i32
    %c0_i32_0 = arith.constant 0 : i32
    return %arg0, %c0_i32 : i32, i32
  }
}

</mosaic_0001>

<llo_original>
// kernel: tpu_custom_call.1
$region0: #{tpu_custom_call.1}
  #allocation0 [shape = 'u32[]', space=smem, size = 0x4, offset = 0x4, fixed_abs, tag = 'smem constant byte address 0x4 - core index']
  #allocation1 [shape = 'u32[144,128]{1,0:T(1,128)}', space=vmem, size = 0x12000, scoped, tag = 'internal scratch']
  %s0 = inlined_call_operand.hbm [shape: f32[16,128], index: 0, kind: input, shape index: {}]
  %s1 = inlined_call_operand.hbm [shape: f32[128,256], index: 1, kind: input, shape index: {}]
  %s2 = inlined_call_operand.vmem [shape: f32[1,256], index: 2, kind: input, shape index: {}]
  %s3 = inlined_call_operand.hbm [shape: f32[256,128], index: 3, kind: input, shape index: {}]
  %s4 = inlined_call_operand.vmem [shape: f32[1,128], index: 4, kind: input, shape index: {}]
  %s5 = inlined_call_operand.hbm [shape: f32[16,128], index: 5, kind: output, shape index: {}]
  %s6 = sld [smem:[#allocation0]]
  $region42: #{tpu_custom_call.1} parent=0
    _
  %s8 = ssub.s32 1, %s6
  %s9 = scalar_select 0, %s8, %s6
  $region1: #{tpu_custom_call.1} parent=0
    #allocation2 [shape = 'u8[8192]{0}', space=vmem, size = 0x2000, scoped, tag = 'input window, operand 0, single buffered']
    #allocation3 [shape = 's32[1]{0}', space=sflag, size = 0x4, scoped, tag = 'scoped memory for tpu_custom_call.1']
    #allocation4 [shape = 's32[1]{0}', space=sflag, size = 0x4, scoped, tag = 'scoped memory for tpu_custom_call.1']
    #allocation5 [shape = 'u8[131072]{0}', space=vmem, size = 0x20000, scoped, tag = 'input window, operand 1, single buffered']
    #allocation6 [shape = 's32[1]{0}', space=sflag, size = 0x4, scoped, tag = 'scoped memory for tpu_custom_call.1']
    #allocation7 [shape = 'u8[131072]{0}', space=vmem, size = 0x20000, scoped, tag = 'input window, operand 3, single buffered']
    #allocation8 [shape = 'u8[8192]{0}', space=vmem, size = 0x2000, scoped, tag = 'output window, operand 0, single buffered']
    %10 = vsyncpa [#allocation3], 0
    %11 = vsyncpa [#allocation6], 0
    %12 = vsyncpa [#allocation4], 0
    // Predicated region
    $region2: #{tpu_custom_call.1} parent=1 // pred_check
      _
    $region3: #{tpu_custom_call.1} parent=1 // pred_check_branch
      %14 = sbr.rel (0) target = $region5
    $region4: #{tpu_custom_call.1} parent=1 // pred_region
      %s16 = ssub.s32 256, 256
      %17 = vsyncadd [#allocation3], %s16
      %s18 = sshll.u32 [#allocation2], 4
      %s19 = int_to_ptr.vmem [resolvable:$true] %s18
      %24 = dma.hbm_to_vmem [thread:$0]  %s0, 256, %s19, [#allocation3], 128, 128, 8
    $region5: #{tpu_custom_call.1} parent=1 // pred_fallthru
      _
    // Predicated region
    $region6: #{tpu_custom_call.1} parent=1 // pred_check
      _
    $region7: #{tpu_custom_call.1} parent=1 // pred_check_branch
      %26 = sbr.rel (0) target = $region9
    $region8: #{tpu_custom_call.1} parent=1 // pred_region
      %s28 = ssub.s32 4096, 4096
      %29 = vsyncadd [#allocation6], %s28
      %s30 = sshll.u32 [#allocation5], 4
      %s31 = int_to_ptr.vmem [resolvable:$true] %s30
      %36 = dma.hbm_to_vmem [thread:$0]  %s1, 4096, %s31, [#allocation6], 256, 256, 16
    $region9: #{tpu_custom_call.1} parent=1 // pred_fallthru
      _
    // Predicated region
    $region10: #{tpu_custom_call.1} parent=1 // pred_check
      _
    $region11: #{tpu_custom_call.1} parent=1 // pred_check_branch
      %38 = sbr.rel (0) target = $region13
    $region12: #{tpu_custom_call.1} parent=1 // pred_region
      _
    $region13: #{tpu_custom_call.1} parent=1 // pred_fallthru
      _
    // Predicated region
    $region14: #{tpu_custom_call.1} parent=1 // pred_check
      _
    $region15: #{tpu_custom_call.1} parent=1 // pred_check_branch
      %40 = sbr.rel (0) target = $region17
    $region16: #{tpu_custom_call.1} parent=1 // pred_region
      %s42 = ssub.s32 4096, 4096
      %43 = vsyncadd [#allocation6], %s42
      %s44 = sshll.u32 [#allocation7], 4
      %s45 = int_to_ptr.vmem [resolvable:$true] %s44
      %50 = dma.hbm_to_vmem [thread:$0]  %s3, 4096, %s45, [#allocation6], 128, 128, 8
    $region17: #{tpu_custom_call.1} parent=1 // pred_fallthru
      _
    // Predicated region
    $region18: #{tpu_custom_call.1} parent=1 // pred_check
      _
    $region19: #{tpu_custom_call.1} parent=1 // pred_check_branch
      %52 = sbr.rel (0) target = $region21
    $region20: #{tpu_custom_call.1} parent=1 // pred_region
      _
    $region21: #{tpu_custom_call.1} parent=1 // pred_fallthru
      _
    // Predicated region
    $region22: #{tpu_custom_call.1} parent=1 // pred_check
      _
    $region23: #{tpu_custom_call.1} parent=1 // pred_check_branch
      %54 = sbr.rel (0) target = $region25
    $region24: #{tpu_custom_call.1} parent=1 // pred_region
      %55 = dma.done [#allocation3], 256
    $region25: #{tpu_custom_call.1} parent=1 // pred_fallthru
      _
    // Predicated region
    $region26: #{tpu_custom_call.1} parent=1 // pred_check
      _
    $region27: #{tpu_custom_call.1} parent=1 // pred_check_branch
      %57 = sbr.rel (0) target = $region29
    $region28: #{tpu_custom_call.1} parent=1 // pred_region
      %58 = dma.done [#allocation6], 4096
    $region29: #{tpu_custom_call.1} parent=1 // pred_fallthru
      _
    // Predicated region
    $region30: #{tpu_custom_call.1} parent=1 // pred_check
      _
    $region31: #{tpu_custom_call.1} parent=1 // pred_check_branch
      %60 = sbr.rel (0) target = $region33
    $region32: #{tpu_custom_call.1} parent=1 // pred_region
      %61 = dma.done [#allocation6], 4096
    $region33: #{tpu_custom_call.1} parent=1 // pred_fallthru
      _
    %v63 = vld [vmem:[#allocation2] sm:$0xff]
    %v64 = vld [vmem:[#allocation2 + $0x8] sm:$0xff]
    %v65 = vpack.c.bf16 %v64, %v63
    %v66 = vld [vmem:[#allocation5] sm:$0xff]
    %v67 = vld [vmem:[#allocation5 + $0x8] sm:$0xff]
    %v68 = vld [vmem:[#allocation5 + $0x10] sm:$0xff]
    %v69 = vld [vmem:[#allocation5 + $0x18] sm:$0xff]
    %v70 = vld [vmem:[#allocation5 + $0x20] sm:$0xff]
    %v71 = vld [vmem:[#allocation5 + $0x28] sm:$0xff]
    %v72 = vld [vmem:[#allocation5 + $0x30] sm:$0xff]
    %v73 = vld [vmem:[#allocation5 + $0x38] sm:$0xff]
    %v74 = vld [vmem:[#allocation5 + $0x40] sm:$0xff]
    %v75 = vld [vmem:[#allocation5 + $0x48] sm:$0xff]
    %v76 = vld [vmem:[#allocation5 + $0x50] sm:$0xff]
    %v77 = vld [vmem:[#allocation5 + $0x58] sm:$0xff]
    %v78 = vld [vmem:[#allocation5 + $0x60] sm:$0xff]
    %v79 = vld [vmem:[#allocation5 + $0x68] sm:$0xff]
    %v80 = vld [vmem:[#allocation5 + $0x70] sm:$0xff]
    %v81 = vld [vmem:[#allocation5 + $0x78] sm:$0xff]
    %v82 = vld [vmem:[#allocation5 + $0x80] sm:$0xff]
    %v83 = vld [vmem:[#allocation5 + $0x88] sm:$0xff]
    %v84 = vld [vmem:[#allocation5 + $0x90] sm:$0xff]
    %v85 = vld [vmem:[#allocation5 + $0x98] sm:$0xff]
    %v86 = vld [vmem:[#allocation5 + $0xa0] sm:$0xff]
    %v87 = vld [vmem:[#allocation5 + $0xa8] sm:$0xff]
    %v88 = vld [vmem:[#allocation5 + $0xb0] sm:$0xff]
    %v89 = vld [vmem:[#allocation5 + $0xb8] sm:$0xff]
    %v90 = vld [vmem:[#allocation5 + $0xc0] sm:$0xff]
    %v91 = vld [vmem:[#allocation5 + $0xc8] sm:$0xff]
    %v92 = vld [vmem:[#allocation5 + $0xd0] sm:$0xff]
    %v93 = vld [vmem:[#allocation5 + $0xd8] sm:$0xff]
    %v94 = vld [vmem:[#allocation5 + $0xe0] sm:$0xff]
    %v95 = vld [vmem:[#allocation5 + $0xe8] sm:$0xff]
    %v96 = vld [vmem:[#allocation5 + $0xf0] sm:$0xff]
    %v97 = vld [vmem:[#allocation5 + $0xf8] sm:$0xff]
    %v98 = vpack.c.bf16 %v68, %v66
    %v99 = vpack.c.bf16 %v69, %v67
    %v100 = vpack.c.bf16 %v72, %v70
    %v101 = vpack.c.bf16 %v73, %v71
    %v102 = vpack.c.bf16 %v76, %v74
    %v103 = vpack.c.bf16 %v77, %v75
    %v104 = vpack.c.bf16 %v80, %v78
    %v105 = vpack.c.bf16 %v81, %v79
    %v106 = vpack.c.bf16 %v84, %v82
    %v107 = vpack.c.bf16 %v85, %v83
    %v108 = vpack.c.bf16 %v88, %v86
    %v109 = vpack.c.bf16 %v89, %v87
    %v110 = vpack.c.bf16 %v92, %v90
    %v111 = vpack.c.bf16 %v93, %v91
    %v112 = vpack.c.bf16 %v96, %v94
    %v113 = vpack.c.bf16 %v97, %v95
    %v114 = vld [vmem:[%s2] sm:$0x3]
    %v116 = vlaneseq
    %v117 = vshrl.u32 %v116, 7
    %v118 = vsub.s32 0, %v117
    %v119 = vrot.slane %v114, %v118
    %v120 = vlaneseq
    %v121 = vshrl.u32 %v120, 7
    %v122 = vsub.s32 1, %v121
    %v123 = vrot.slane %v114, %v122
    %126 = vmatprep.subr.bf16.mxu0 %v113
    %127 = vmatpush1.bf16.msra.mxu0 %v112
    %128 = vmatprep.subr.bf16.mxu0 %v111
    %129 = vmatpush1.bf16.msra.mxu0 %v110
    %130 = vmatprep.subr.bf16.mxu0 %v109
    %131 = vmatpush1.bf16.msra.mxu0 %v108
    %132 = vmatprep.subr.bf16.mxu0 %v107
    %133 = vmatpush1.bf16.msra.mxu0 %v106
    %134 = vmatprep.subr.bf16.mxu0 %v105
    %135 = vmatpush1.bf16.msra.mxu0 %v104
    %136 = vmatprep.subr.bf16.mxu0 %v103
    %137 = vmatpush1.bf16.msra.mxu0 %v102
    %138 = vmatprep.subr.bf16.mxu0 %v101
    %139 = vmatpush1.bf16.msra.mxu0 %v100
    %140 = vmatprep.subr.bf16.mxu0 %v99
    %141 = vmatpush1.bf16.msra.mxu0 %v98
    %142 = vmatprep.subr.bf16.mxu0 0
    %143 = vmatpush2.bf16.msra.mxu0 0
    %144 = vmatprep.subr.bf16.mxu0 0
    %145 = vmatpush2.bf16.msra.mxu0 0
    %146 = vmatprep.subr.bf16.mxu0 0
    %147 = vmatpush2.bf16.msra.mxu0 0
    %148 = vmatprep.subr.bf16.mxu0 0
    %149 = vmatpush2.bf16.msra.mxu0 0
    %150 = vmatprep.subr.bf16.mxu0 0
    %151 = vmatpush2.bf16.msra.mxu0 0
    %152 = vmatprep.subr.bf16.mxu0 0
    %153 = vmatpush2.bf16.msra.mxu0 0
    %154 = vmatprep.subr.bf16.mxu0 0
    %155 = vmatpush2.bf16.msra.mxu0 0
    %156 = vmatprep.subr.bf16.mxu0 0
    %157 = vmatpush2.bf16.msra.mxu0 0
    %158 = vmatprep.mubr.bf16.mxu0 0
    %159 = vmatmul.mubr.bf16.gmra.mxu0 %v65
    %v160 = vpop.f32.mrf.mxu0
    %v161 = vadd.f32 %v119, %v160
    %v162 = vpop.f32.mrf.mxu0
    %v163 = vadd.f32 %v123, %v162
    %v164 = vpop.f32.mrf.mxu0
    %v165 = vadd.f32 %v119, %v164
    %v166 = vpop.f32.mrf.mxu0
    %v167 = vadd.f32 %v123, %v166
    %168 = vdwg.mxu0
    %v169 = vmax.f32 %v161, 0.0
    %v170 = vmax.f32 %v163, 0.0
    %v171 = vmax.f32 %v165, 0.0
    %v172 = vmax.f32 %v167, 0.0
    %v173 = vld [vmem:[#allocation7] sm:$0xff]
    %v174 = vld [vmem:[#allocation7 + $0x8] sm:$0xff]
    %v175 = vld [vmem:[#allocation7 + $0x10] sm:$0xff]
    %v176 = vld [vmem:[#allocation7 + $0x18] sm:$0xff]
    %v177 = vld [vmem:[#allocation7 + $0x20] sm:$0xff]
    %v178 = vld [vmem:[#allocation7 + $0x28] sm:$0xff]
    %v179 = vld [vmem:[#allocation7 + $0x30] sm:$0xff]
    %v180 = vld [vmem:[#allocation7 + $0x38] sm:$0xff]
    %v181 = vld [vmem:[#allocation7 + $0x40] sm:$0xff]
    %v182 = vld [vmem:[#allocation7 + $0x48] sm:$0xff]
    %v183 = vld [vmem:[#allocation7 + $0x50] sm:$0xff]
    %v184 = vld [vmem:[#allocation7 + $0x58] sm:$0xff]
    %v185 = vld [vmem:[#allocation7 + $0x60] sm:$0xff]
    %v186 = vld [vmem:[#allocation7 + $0x68] sm:$0xff]
    %v187 = vld [vmem:[#allocation7 + $0x70] sm:$0xff]
    %v188 = vld [vmem:[#allocation7 + $0x78] sm:$0xff]
    %v189 = vld [vmem:[#allocation7 + $0x80] sm:$0xff]
    %v190 = vld [vmem:[#allocation7 + $0x88] sm:$0xff]
    %v191 = vld [vmem:[#allocation7 + $0x90] sm:$0xff]
    %v192 = vld [vmem:[#allocation7 + $0x98] sm:$0xff]
    %v193 = vld [vmem:[#allocation7 + $0xa0] sm:$0xff]
    %v194 = vld [vmem:[#allocation7 + $0xa8] sm:$0xff]
    %v195 = vld [vmem:[#allocation7 + $0xb0] sm:$0xff]
    %v196 = vld [vmem:[#allocation7 + $0xb8] sm:$0xff]
    %v197 = vld [vmem:[#allocation7 + $0xc0] sm:$0xff]
    %v198 = vld [vmem:[#allocation7 + $0xc8] sm:$0xff]
    %v199 = vld [vmem:[#allocation7 + $0xd0] sm:$0xff]
    %v200 = vld [vmem:[#allocation7 + $0xd8] sm:$0xff]
    %v201 = vld [vmem:[#allocation7 + $0xe0] sm:$0xff]
    %v202 = vld [vmem:[#allocation7 + $0xe8] sm:$0xff]
    %v203 = vld [vmem:[#allocation7 + $0xf0] sm:$0xff]
    %v204 = vld [vmem:[#allocation7 + $0xf8] sm:$0xff]
    %v205 = vpack.c.bf16 %v174, %v173
    %v206 = vpack.c.bf16 %v176, %v175
    %v207 = vpack.c.bf16 %v178, %v177
    %v208 = vpack.c.bf16 %v180, %v179
    %v209 = vpack.c.bf16 %v182, %v181
    %v210 = vpack.c.bf16 %v184, %v183
    %v211 = vpack.c.bf16 %v186, %v185
    %v212 = vpack.c.bf16 %v188, %v187
    %v213 = vpack.c.bf16 %v190, %v189
    %v214 = vpack.c.bf16 %v192, %v191
    %v215 = vpack.c.bf16 %v194, %v193
    %v216 = vpack.c.bf16 %v196, %v195
    %v217 = vpack.c.bf16 %v198, %v197
    %v218 = vpack.c.bf16 %v200, %v199
    %v219 = vpack.c.bf16 %v202, %v201
    %v220 = vpack.c.bf16 %v204, %v203
    %v221 = vpack.c.bf16 %v171, %v169
    %v222 = vpack.c.bf16 %v172, %v170
    %v223 = vld [vmem:[%s4] sm:$0x1]
    %v225 = vlaneseq
    %v226 = vshrl.u32 %v225, 7
    %v227 = vsub.s32 0, %v226
    %v228 = vrot.slane %v223, %v227
    %230 = vmatprep.subr.bf16.mxu0 0
    %231 = vmatpush1.bf16.msra.mxu0 %v212
    %232 = vmatprep.subr.bf16.mxu0 0
    %233 = vmatpush1.bf16.msra.mxu0 %v211
    %234 = vmatprep.subr.bf16.mxu0 0
    %235 = vmatpush1.bf16.msra.mxu0 %v210
    %236 = vmatprep.subr.bf16.mxu0 0
    %237 = vmatpush1.bf16.msra.mxu0 %v209
    %238 = vmatprep.subr.bf16.mxu0 0
    %239 = vmatpush1.bf16.msra.mxu0 %v208
    %240 = vmatprep.subr.bf16.mxu0 0
    %241 = vmatpush1.bf16.msra.mxu0 %v207
    %242 = vmatprep.subr.bf16.mxu0 0
    %243 = vmatpush1.bf16.msra.mxu0 %v206
    %244 = vmatprep.subr.bf16.mxu0 0
    %245 = vmatpush1.bf16.msra.mxu0 %v205
    %246 = vmatprep.subr.bf16.mxu0 0
    %247 = vmatpush2.bf16.msra.mxu0 %v220
    %248 = vmatprep.subr.bf16.mxu0 0
    %249 = vmatpush2.bf16.msra.mxu0 %v219
    %250 = vmatprep.subr.bf16.mxu0 0
    %251 = vmatpush2.bf16.msra.mxu0 %v218
    %252 = vmatprep.subr.bf16.mxu0 0
    %253 = vmatpush2.bf16.msra.mxu0 %v217
    %254 = vmatprep.subr.bf16.mxu0 0
    %255 = vmatpush2.bf16.msra.mxu0 %v216
    %256 = vmatprep.subr.bf16.mxu0 0
    %257 = vmatpush2.bf16.msra.mxu0 %v215
    %258 = vmatprep.subr.bf16.mxu0 0
    %259 = vmatpush2.bf16.msra.mxu0 %v214
    %260 = vmatprep.subr.bf16.mxu0 0
    %261 = vmatpush2.bf16.msra.mxu0 %v213
    %262 = vmatprep.mubr.bf16.mxu0 %v222
    %263 = vmatmul.mubr.bf16.gmra.mxu0 %v221
    %v264 = vpop.f32.mrf.mxu0
    %v265 = vadd.f32 %v228, %v264
    %v266 = vpop.f32.mrf.mxu0
    %v267 = vpop.f32.mrf.mxu0
    %v268 = vadd.f32 %v228, %v267
    %v269 = vpop.f32.mrf.mxu0
    %270 = vdwg.mxu0
    %271 = vst [vmem:[#allocation8] sm:$0xff] %v265
    %272 = vst [vmem:[#allocation8 + $0x8] sm:$0xff] %v268
    // Predicated region
    $region34: #{tpu_custom_call.1} parent=1 // pred_check
      _
    $region35: #{tpu_custom_call.1} parent=1 // pred_check_branch
      %274 = sbr.rel (0) target = $region37
    $region36: #{tpu_custom_call.1} parent=1 // pred_region
      %s276 = ssub.s32 256, 256
      %277 = vsyncadd [#allocation4], %s276
      %s278 = sshll.u32 [#allocation8], 4
      %s279 = int_to_ptr.vmem [resolvable:$true] %s278
      %284 = dma.vmem_to_hbm [thread:$0]  %s279, 256, %s5, [#allocation4], 128, 128, 8
    $region37: #{tpu_custom_call.1} parent=1 // pred_fallthru
      _
    // Predicated region
    $region38: #{tpu_custom_call.1} parent=1 // pred_check
      _
    $region39: #{tpu_custom_call.1} parent=1 // pred_check_branch
      %286 = sbr.rel (0) target = $region41
    $region40: #{tpu_custom_call.1} parent=1 // pred_region
      %287 = dma.done [#allocation4], 256
    $region41: #{tpu_custom_call.1} parent=1 // pred_fallthru
      _
    %288 = vsyncpa [#allocation3], 1
    %289 = vsyncpa [#allocation6], 1
    %290 = vsyncpa [#allocation4], 1

// kernel: tpu_custom_call.1
$region0: #{tpu_custom_call.1}
  #allocation0 [shape = 'u32[]', space=smem, size = 0x4, offset = 0x4, fixed_abs, tag = 'smem constant byte address 0x4 - core index']
  #allocation1 [shape = 'u32[144,128]{1,0:T(1,128)}', space=vmem, size = 0x12000, scoped, tag = 'internal scratch']
  %s0 = inlined_call_operand.hbm [shape: f32[16,128], index: 0, kind: input, shape index: {}]
  %s1 = inlined_call_operand.hbm [shape: f32[128,256], index: 1, kind: input, shape index: {}]
  %s2 = inlined_call_operand.vmem [shape: f32[1,256], index: 2, kind: input, shape index: {}]
  %s3 = inlined_call_operand.hbm [shape: f32[256,128], index: 3, kind: input, shape index: {}]
  %s4 = inlined_call_operand.vmem [shape: f32[1,128], index: 4, kind: input, shape index: {}]
  %s5 = inlined_call_operand.hbm [shape: f32[16,128], index: 5, kind: output, shape index: {}]
  %s6 = sld [smem:[#allocation0]]
  $region42: #{tpu_custom_call.1} parent=0
    _
  %s8 = ssub.s32 1, %s6
  %s9 = scalar_select 0, %s8, %s6
  $region1: #{tpu_custom_call.1} parent=0
    #allocation2 [shape = 'u8[8192]{0}', space=vmem, size = 0x2000, scoped, tag = 'input window, operand 0, single buffered']
    #allocation3 [shape = 's32[1]{0}', space=sflag, size = 0x4, scoped, tag = 'scoped memory for tpu_custom_call.1']
    #allocation4 [shape = 's32[1]{0}', space=sflag, size = 0x4, scoped, tag = 'scoped memory for tpu_custom_call.1']
    #allocation5 [shape = 'u8[131072]{0}', space=vmem, size = 0x20000, scoped, tag = 'input window, operand 1, single buffered']
    #allocation6 [shape = 's32[1]{0}', space=sflag, size = 0x4, scoped, tag = 'scoped memory for tpu_custom_call.1']
    #allocation7 [shape = 'u8[131072]{0}', space=vmem, size = 0x20000, scoped, tag = 'input window, operand 3, single buffered']
    #allocation8 [shape = 'u8[8192]{0}', space=vmem, size = 0x2000, scoped, tag = 'output window, operand 0, single buffered']
    %10 = vsyncpa [#allocation3], 0
    %11 = vsyncpa [#allocation6], 0
    %12 = vsyncpa [#allocation4], 0
    // Predicated region
    $region2: #{tpu_custom_call.1} parent=1 // pred_check
      _
    $region3: #{tpu_custom_call.1} parent=1 // pred_check_branch
      %14 = sbr.rel (0) target = $region5
    $region4: #{tpu_custom_call.1} parent=1 // pred_region
      %s16 = ssub.s32 256, 256
      %17 = vsyncadd [#allocation3], %s16
      %s18 = sshll.u32 [#allocation2], 4
      %s19 = int_to_ptr.vmem [resolvable:$true] %s18
      %24 = dma.hbm_to_vmem [thread:$0]  %s0, 256, %s19, [#allocation3], 128, 128, 8
    $region5: #{tpu_custom_call.1} parent=1 // pred_fallthru
      _
    // Predicated region
    $region6: #{tpu_custom_call.1} parent=1 // pred_check
      _
    $region7: #{tpu_custom_call.1} parent=1 // pred_check_branch
      %26 = sbr.rel (0) target = $region9
    $region8: #{tpu_custom_call.1} parent=1 // pred_region
      %s28 = ssub.s32 4096, 4096
      %29 = vsyncadd [#allocation6], %s28
      %s30 = sshll.u32 [#allocation5], 4
      %s31 = int_to_ptr.vmem [resolvable:$true] %s30
      %36 = dma.hbm_to_vmem [thread:$0]  %s1, 4096, %s31, [#allocation6], 256, 256, 16
    $region9: #{tpu_custom_call.1} parent=1 // pred_fallthru
      _
    // Predicated region
    $region10: #{tpu_custom_call.1} parent=1 // pred_check
      _
    $region11: #{tpu_custom_call.1} parent=1 // pred_check_branch
      %38 = sbr.rel (0) target = $region13
    $region12: #{tpu_custom_call.1} parent=1 // pred_region
      _
    $region13: #{tpu_custom_call.1} parent=1 // pred_fallthru
      _
    // Predicated region
    $region14: #{tpu_custom_call.1} parent=1 // pred_check
      _
    $region15: #{tpu_custom_call.1} parent=1 // pred_check_branch
      %40 = sbr.rel (0) target = $region17
    $region16: #{tpu_custom_call.1} parent=1 // pred_region
      %s42 = ssub.s32 4096, 4096
      %43 = vsyncadd [#allocation6], %s42
      %s44 = sshll.u32 [#allocation7], 4
      %s45 = int_to_ptr.vmem [resolvable:$true] %s44
      %50 = dma.hbm_to_vmem [thread:$0]  %s3, 4096, %s45, [#allocation6], 128, 128, 8
    $region17: #{tpu_custom_call.1} parent=1 // pred_fallthru
      _
    // Predicated region
    $region18: #{tpu_custom_call.1} parent=1 // pred_check
      _
    $region19: #{tpu_custom_call.1} parent=1 // pred_check_branch
      %52 = sbr.rel (0) target = $region21
    $region20: #{tpu_custom_call.1} parent=1 // pred_region
      _
    $region21: #{tpu_custom_call.1} parent=1 // pred_fallthru
      _
    // Predicated region
    $region22: #{tpu_custom_call.1} parent=1 // pred_check
      _
    $region23: #{tpu_custom_call.1} parent=1 // pred_check_branch
      %54 = sbr.rel (0) target = $region25
    $region24: #{tpu_custom_call.1} parent=1 // pred_region
      %55 = dma.done [#allocation3], 256
    $region25: #{tpu_custom_call.1} parent=1 // pred_fallthru
      _
    // Predicated region
    $region26: #{tpu_custom_call.1} parent=1 // pred_check
      _
    $region27: #{tpu_custom_call.1} parent=1 // pred_check_branch
      %57 = sbr.rel (0) target = $region29
    $region28: #{tpu_custom_call.1} parent=1 // pred_region
      %58 = dma.done [#allocation6], 4096
    $region29: #{tpu_custom_call.1} parent=1 // pred_fallthru
      _
    // Predicated region
    $region30: #{tpu_custom_call.1} parent=1 // pred_check
      _
    $region31: #{tpu_custom_call.1} parent=1 // pred_check_branch
      %60 = sbr.rel (0) target = $region33
    $region32: #{tpu_custom_call.1} parent=1 // pred_region
      %61 = dma.done [#allocation6], 4096
    $region33: #{tpu_custom_call.1} parent=1 // pred_fallthru
      _
    %v63 = vld [vmem:[#allocation2] sm:$0xff]
    %v64 = vld [vmem:[#allocation2 + $0x8] sm:$0xff]
    %v65 = vpack.c.bf16 %v64, %v63
    %v66 = vld [vmem:[#allocation5] sm:$0xff]
    %v67 = vld [vmem:[#allocation5 + $0x8] sm:$0xff]
    %v68 = vld [vmem:[#allocation5 + $0x10] sm:$0xff]
    %v69 = vld [vmem:[#allocation5 + $0x18] sm:$0xff]
    %v70 = vld [vmem:[#allocation5 + $0x20] sm:$0xff]
    %v71 = vld [vmem:[#allocation5 + $0x28] sm:$0xff]
    %v72 = vld [vmem:[#allocation5 + $0x30] sm:$0xff]
    %v73 = vld [vmem:[#allocation5 + $0x38] sm:$0xff]
    %v74 = vld [vmem:[#allocation5 + $0x40] sm:$0xff]
    %v75 = vld [vmem:[#allocation5 + $0x48] sm:$0xff]
    %v76 = vld [vmem:[#allocation5 + $0x50] sm:$0xff]
    %v77 = vld [vmem:[#allocation5 + $0x58] sm:$0xff]
    %v78 = vld [vmem:[#allocation5 + $0x60] sm:$0xff]
    %v79 = vld [vmem:[#allocation5 + $0x68] sm:$0xff]
    %v80 = vld [vmem:[#allocation5 + $0x70] sm:$0xff]
    %v81 = vld [vmem:[#allocation5 + $0x78] sm:$0xff]
    %v82 = vld [vmem:[#allocation5 + $0x80] sm:$0xff]
    %v83 = vld [vmem:[#allocation5 + $0x88] sm:$0xff]
    %v84 = vld [vmem:[#allocation5 + $0x90] sm:$0xff]
    %v85 = vld [vmem:[#allocation5 + $0x98] sm:$0xff]
    %v86 = vld [vmem:[#allocation5 + $0xa0] sm:$0xff]
    %v87 = vld [vmem:[#allocation5 + $0xa8] sm:$0xff]
    %v88 = vld [vmem:[#allocation5 + $0xb0] sm:$0xff]
    %v89 = vld [vmem:[#allocation5 + $0xb8] sm:$0xff]
    %v90 = vld [vmem:[#allocation5 + $0xc0] sm:$0xff]
    %v91 = vld [vmem:[#allocation5 + $0xc8] sm:$0xff]
    %v92 = vld [vmem:[#allocation5 + $0xd0] sm:$0xff]
    %v93 = vld [vmem:[#allocation5 + $0xd8] sm:$0xff]
    %v94 = vld [vmem:[#allocation5 + $0xe0] sm:$0xff]
    %v95 = vld [vmem:[#allocation5 + $0xe8] sm:$0xff]
    %v96 = vld [vmem:[#allocation5 + $0xf0] sm:$0xff]
    %v97 = vld [vmem:[#allocation5 + $0xf8] sm:$0xff]
    %v98 = vpack.c.bf16 %v68, %v66
    %v99 = vpack.c.bf16 %v69, %v67
    %v100 = vpack.c.bf16 %v72, %v70
    %v101 = vpack.c.bf16 %v73, %v71
    %v102 = vpack.c.bf16 %v76, %v74
    %v103 = vpack.c.bf16 %v77, %v75
    %v104 = vpack.c.bf16 %v80, %v78
    %v105 = vpack.c.bf16 %v81, %v79
    %v106 = vpack.c.bf16 %v84, %v82
    %v107 = vpack.c.bf16 %v85, %v83
    %v108 = vpack.c.bf16 %v88, %v86
    %v109 = vpack.c.bf16 %v89, %v87
    %v110 = vpack.c.bf16 %v92, %v90
    %v111 = vpack.c.bf16 %v93, %v91
    %v112 = vpack.c.bf16 %v96, %v94
    %v113 = vpack.c.bf16 %v97, %v95
    %v114 = vld [vmem:[%s2] sm:$0x3]
    %v116 = vlaneseq
    %v117 = vshrl.u32 %v116, 7
    %v118 = vsub.s32 0, %v117
    %v119 = vrot.slane %v114, %v118
    %v120 = vlaneseq
    %v121 = vshrl.u32 %v120, 7
    %v122 = vsub.s32 1, %v121
    %v123 = vrot.slane %v114, %v122
    %126 = vmatprep.subr.bf16.mxu0 %v113
    %127 = vmatpush1.bf16.msra.mxu0 %v112
    %128 = vmatprep.subr.bf16.mxu0 %v111
    %129 = vmatpush1.bf16.msra.mxu0 %v110
    %130 = vmatprep.subr.bf16.mxu0 %v109
    %131 = vmatpush1.bf16.msra.mxu0 %v108
    %132 = vmatprep.subr.bf16.mxu0 %v107
    %133 = vmatpush1.bf16.msra.mxu0 %v106
    %134 = vmatprep.subr.bf16.mxu0 %v105
    %135 = vmatpush1.bf16.msra.mxu0 %v104
    %136 = vmatprep.subr.bf16.mxu0 %v103
    %137 = vmatpush1.bf16.msra.mxu0 %v102
    %138 = vmatprep.subr.bf16.mxu0 %v101
    %139 = vmatpush1.bf16.msra.mxu0 %v100
    %140 = vmatprep.subr.bf16.mxu0 %v99
    %141 = vmatpush1.bf16.msra.mxu0 %v98
    %142 = vmatprep.subr.bf16.mxu0 0
    %143 = vmatpush2.bf16.msra.mxu0 0
    %144 = vmatprep.subr.bf16.mxu0 0
    %145 = vmatpush2.bf16.msra.mxu0 0
    %146 = vmatprep.subr.bf16.mxu0 0
    %147 = vmatpush2.bf16.msra.mxu0 0
    %148 = vmatprep.subr.bf16.mxu0 0
    %149 = vmatpush2.bf16.msra.mxu0 0
    %150 = vmatprep.subr.bf16.mxu0 0
    %151 = vmatpush2.bf16.msra.mxu0 0
    %152 = vmatprep.subr.bf16.mxu0 0
    %153 = vmatpush2.bf16.msra.mxu0 0
    %154 = vmatprep.subr.bf16.mxu0 0
    %155 = vmatpush2.bf16.msra.mxu0 0
    %156 = vmatprep.subr.bf16.mxu0 0
    %157 = vmatpush2.bf16.msra.mxu0 0
    %158 = vmatprep.mubr.bf16.mxu0 0
    %159 = vmatmul.mubr.bf16.gmra.mxu0 %v65
    %v160 = vpop.f32.mrf.mxu0
    %v161 = vadd.f32 %v119, %v160
    %v162 = vpop.f32.mrf.mxu0
    %v163 = vadd.f32 %v123, %v162
    %v164 = vpop.f32.mrf.mxu0
    %v165 = vadd.f32 %v119, %v164
    %v166 = vpop.f32.mrf.mxu0
    %v167 = vadd.f32 %v123, %v166
    %168 = vdwg.mxu0
    %v169 = vmax.f32 %v161, 0.0
    %v170 = vmax.f32 %v163, 0.0
    %v171 = vmax.f32 %v165, 0.0
    %v172 = vmax.f32 %v167, 0.0
    %v173 = vld [vmem:[#allocation7] sm:$0xff]
    %v174 = vld [vmem:[#allocation7 + $0x8] sm:$0xff]
    %v175 = vld [vmem:[#allocation7 + $0x10] sm:$0xff]
    %v176 = vld [vmem:[#allocation7 + $0x18] sm:$0xff]
    %v177 = vld [vmem:[#allocation7 + $0x20] sm:$0xff]
    %v178 = vld [vmem:[#allocation7 + $0x28] sm:$0xff]
    %v179 = vld [vmem:[#allocation7 + $0x30] sm:$0xff]
    %v180 = vld [vmem:[#allocation7 + $0x38] sm:$0xff]
    %v181 = vld [vmem:[#allocation7 + $0x40] sm:$0xff]
    %v182 = vld [vmem:[#allocation7 + $0x48] sm:$0xff]
    %v183 = vld [vmem:[#allocation7 + $0x50] sm:$0xff]
    %v184 = vld [vmem:[#allocation7 + $0x58] sm:$0xff]
    %v185 = vld [vmem:[#allocation7 + $0x60] sm:$0xff]
    %v186 = vld [vmem:[#allocation7 + $0x68] sm:$0xff]
    %v187 = vld [vmem:[#allocation7 + $0x70] sm:$0xff]
    %v188 = vld [vmem:[#allocation7 + $0x78] sm:$0xff]
    %v189 = vld [vmem:[#allocation7 + $0x80] sm:$0xff]
    %v190 = vld [vmem:[#allocation7 + $0x88] sm:$0xff]
    %v191 = vld [vmem:[#allocation7 + $0x90] sm:$0xff]
    %v192 = vld [vmem:[#allocation7 + $0x98] sm:$0xff]
    %v193 = vld [vmem:[#allocation7 + $0xa0] sm:$0xff]
    %v194 = vld [vmem:[#allocation7 + $0xa8] sm:$0xff]
    %v195 = vld [vmem:[#allocation7 + $0xb0] sm:$0xff]
    %v196 = vld [vmem:[#allocation7 + $0xb8] sm:$0xff]
    %v197 = vld [vmem:[#allocation7 + $0xc0] sm:$0xff]
    %v198 = vld [vmem:[#allocation7 + $0xc8] sm:$0xff]
    %v199 = vld [vmem:[#allocation7 + $0xd0] sm:$0xff]
    %v200 = vld [vmem:[#allocation7 + $0xd8] sm:$0xff]
    %v201 = vld [vmem:[#allocation7 + $0xe0] sm:$0xff]
    %v202 = vld [vmem:[#allocation7 + $0xe8] sm:$0xff]
    %v203 = vld [vmem:[#allocation7 + $0xf0] sm:$0xff]
    %v204 = vld [vmem:[#allocation7 + $0xf8] sm:$0xff]
    %v205 = vpack.c.bf16 %v174, %v173
    %v206 = vpack.c.bf16 %v176, %v175
    %v207 = vpack.c.bf16 %v178, %v177
    %v208 = vpack.c.bf16 %v180, %v179
    %v209 = vpack.c.bf16 %v182, %v181
    %v210 = vpack.c.bf16 %v184, %v183
    %v211 = vpack.c.bf16 %v186, %v185
    %v212 = vpack.c.bf16 %v188, %v187
    %v213 = vpack.c.bf16 %v190, %v189
    %v214 = vpack.c.bf16 %v192, %v191
    %v215 = vpack.c.bf16 %v194, %v193
    %v216 = vpack.c.bf16 %v196, %v195
    %v217 = vpack.c.bf16 %v198, %v197
    %v218 = vpack.c.bf16 %v200, %v199
    %v219 = vpack.c.bf16 %v202, %v201
    %v220 = vpack.c.bf16 %v204, %v203
    %v221 = vpack.c.bf16 %v171, %v169
    %v222 = vpack.c.bf16 %v172, %v170
    %v223 = vld [vmem:[%s4] sm:$0x1]
    %v225 = vlaneseq
    %v226 = vshrl.u32 %v225, 7
    %v227 = vsub.s32 0, %v226
    %v228 = vrot.slane %v223, %v227
    %230 = vmatprep.subr.bf16.mxu0 0
    %231 = vmatpush1.bf16.msra.mxu0 %v212
    %232 = vmatprep.subr.bf16.mxu0 0
    %233 = vmatpush1.bf16.msra.mxu0 %v211
    %234 = vmatprep.subr.bf16.mxu0 0
    %235 = vmatpush1.bf16.msra.mxu0 %v210
    %236 = vmatprep.subr.bf16.mxu0 0
    %237 = vmatpush1.bf16.msra.mxu0 %v209
    %238 = vmatprep.subr.bf16.mxu0 0
    %239 = vmatpush1.bf16.msra.mxu0 %v208
    %240 = vmatprep.subr.bf16.mxu0 0
    %241 = vmatpush1.bf16.msra.mxu0 %v207
    %242 = vmatprep.subr.bf16.mxu0 0
    %243 = vmatpush1.bf16.msra.mxu0 %v206
    %244 = vmatprep.subr.bf16.mxu0 0
    %245 = vmatpush1.bf16.msra.mxu0 %v205
    %246 = vmatprep.subr.bf16.mxu0 0
    %247 = vmatpush2.bf16.msra.mxu0 %v220
    %248 = vmatprep.subr.bf16.mxu0 0
    %249 = vmatpush2.bf16.msra.mxu0 %v219
    %250 = vmatprep.subr.bf16.mxu0 0
    %251 = vmatpush2.bf16.msra.mxu0 %v218
    %252 = vmatprep.subr.bf16.mxu0 0
    %253 = vmatpush2.bf16.msra.mxu0 %v217
    %254 = vmatprep.subr.bf16.mxu0 0
    %255 = vmatpush2.bf16.msra.mxu0 %v216
    %256 = vmatprep.subr.bf16.mxu0 0
    %257 = vmatpush2.bf16.msra.mxu0 %v215
    %258 = vmatprep.subr.bf16.mxu0 0
    %259 = vmatpush2.bf16.msra.mxu0 %v214
    %260 = vmatprep.subr.bf16.mxu0 0
    %261 = vmatpush2.bf16.msra.mxu0 %v213
    %262 = vmatprep.mubr.bf16.mxu0 %v222
    %263 = vmatmul.mubr.bf16.gmra.mxu0 %v221
    %v264 = vpop.f32.mrf.mxu0
    %v265 = vadd.f32 %v228, %v264
    %v266 = vpop.f32.mrf.mxu0
    %v267 = vpop.f32.mrf.mxu0
    %v268 = vadd.f32 %v228, %v267
    %v269 = vpop.f32.mrf.mxu0
    %270 = vdwg.mxu0
    %271 = vst [vmem:[#allocation8] sm:$0xff] %v265
    %272 = vst [vmem:[#allocation8 + $0x8] sm:$0xff] %v268
    // Predicated region
    $region34: #{tpu_custom_call.1} parent=1 // pred_check
      _
    $region35: #{tpu_custom_call.1} parent=1 // pred_check_branch
      %274 = sbr.rel (0) target = $region37
    $region36: #{tpu_custom_call.1} parent=1 // pred_region
      %s276 = ssub.s32 256, 256
      %277 = vsyncadd [#allocation4], %s276
      %s278 = sshll.u32 [#allocation8], 4
      %s279 = int_to_ptr.vmem [resolvable:$true] %s278
      %284 = dma.vmem_to_hbm [thread:$0]  %s279, 256, %s5, [#allocation4], 128, 128, 8
    $region37: #{tpu_custom_call.1} parent=1 // pred_fallthru
      _
    // Predicated region
    $region38: #{tpu_custom_call.1} parent=1 // pred_check
      _
    $region39: #{tpu_custom_call.1} parent=1 // pred_check_branch
      %286 = sbr.rel (0) target = $region41
    $region40: #{tpu_custom_call.1} parent=1 // pred_region
      %287 = dma.done [#allocation4], 256
    $region41: #{tpu_custom_call.1} parent=1 // pred_fallthru
      _
    %288 = vsyncpa [#allocation3], 1
    %289 = vsyncpa [#allocation6], 1
    %290 = vsyncpa [#allocation4], 1

</llo_original>
